<compile_context>
chip_gen: v7x
topology: tpu7x:2x2x1
jax: 0.10.0
libtpu: 0.0.40
codegen_flags: <defaults>
</compile_context>

<pallas_src>
import jax
import jax.numpy as jnp
from jax.experimental import pallas as pl
from jax.experimental.pallas import tpu as pltpu


def _round_up(v, m):
    return ((v + m - 1) // m) * m


# --------------------------------------------------------------------------
# Tiny path: grid-free, pad-free, unrolled VPU broadcast-mul-add.
# Only for truly tiny problems (K <= 8, M and N <= 128), e.g. (1,2)@(2,3).
# --------------------------------------------------------------------------
def _tiny_matmul_kernel(x_ref, w_ref, o_ref):
    x = x_ref[...].astype(jnp.float32)   # (M, K)
    w = w_ref[...].astype(jnp.float32)   # (K, N)
    k_dim = x.shape[1]
    acc = x[:, 0:1] * w[0:1, :]
    for kk in range(1, k_dim):           # statically unrolled, K <= 8
        acc = acc + x[:, kk:kk + 1] * w[kk:kk + 1, :]
    o_ref[...] = acc.astype(o_ref.dtype)


def _tiny_matmul(x, weight, out_dtype):
    m, _ = x.shape
    _, n = weight.shape
    # Full (unpadded) arrays as single VMEM blocks; block == full array dims
    # waives the (8,128) divisibility rule, Mosaic pads layout internally.
    return pl.pallas_call(
        _tiny_matmul_kernel,
        out_shape=jax.ShapeDtypeStruct((m, n), out_dtype),
        in_specs=[
            pl.BlockSpec(memory_space=pltpu.MemorySpace.VMEM),
            pl.BlockSpec(memory_space=pltpu.MemorySpace.VMEM),
        ],
        out_specs=pl.BlockSpec(memory_space=pltpu.MemorySpace.VMEM),
    )(x, weight)


# --------------------------------------------------------------------------
# Scaled path: tiled MXU matmul, f32 VMEM accumulator, final-step writeback.
# --------------------------------------------------------------------------
def _tiled_matmul_kernel(x_ref, w_ref, o_ref, acc_ref):
    @pl.when(pl.program_id(2) == 0)
    def _():
        acc_ref[...] = jnp.zeros_like(acc_ref)

    acc_ref[...] += jnp.dot(
        x_ref[...], w_ref[...], preferred_element_type=jnp.float32
    )

    # The output block is resident across the K axis; cast + store only once
    # on the final K step (saves K-1 cast passes and vst-slot pressure).
    @pl.when(pl.program_id(2) == pl.num_programs(2) - 1)
    def _():
        o_ref[...] = acc_ref[...].astype(o_ref.dtype)


def _tiled_matmul(x, weight, out_dtype, *, tm=512, tn=512, tk=512):
    # VMEM budget at tm=tn=tk=512 f32: x/w/out tiles 1 MiB each, double
    # buffered => ~6 MiB, + 1 MiB accumulator = ~7 MiB.  Fits the scoped-VMEM
    # default on every generation (v5e 16 MiB, v6e/v7x 32 MiB), so no
    # vmem_limit_bytes override is required.  tn=512 keeps the output store a
    # wide unmasked vst; tm/tn are multiples of 256 so v6e/v7x MXU passes are
    # fully filled.
    #
    # NOTE(perf, v6e/v7x): casting f32 operands to bfloat16 here (keeping the
    # f32 accumulator) gives ~3x MXU throughput at compute-bound sizes; kept
    # in the caller's dtype to preserve torch.matmul f32 numerics.  bf16
    # inputs from the caller already take the fast MXU-native path.
    m, k = x.shape
    _, n = weight.shape

    # Clamp each tile to the full dim when the dim is smaller: a block equal
    # to the full array dim is exempt from the (8,128) divisibility rule, so
    # small/medium shapes need no padding and degenerate to one grid step.
    tm_e = tm if m > tm else m
    tn_e = tn if n > tn else n
    tk_e = tk if k > tk else k

    # Only the contraction (K) dim needs zero padding for correctness: a
    # ragged K edge block would feed garbage into the accumulation.  Ragged
    # M/N edges are safe: the cdiv grid loads partial blocks and Pallas masks
    # the out-of-bounds portion of the output writeback, and garbage input
    # rows/cols only touch that masked output region.
    if k > tk_e and k % tk_e != 0:
        kp = _round_up(k, tk_e)
        x = jnp.pad(x, ((0, 0), (0, kp - k)))
        weight = jnp.pad(weight, ((0, kp - k), (0, 0)))
    else:
        kp = k

    grid_m = pl.cdiv(m, tm_e)
    grid_n = pl.cdiv(n, tn_e)
    grid_k = kp // tk_e

    cost = pl.CostEstimate(
        flops=2 * m * n * kp,
        transcendentals=0,
        bytes_accessed=int(
            x.size * x.dtype.itemsize * grid_n          # x re-read per N tile
            + weight.size * weight.dtype.itemsize * grid_m  # w re-read per M tile
            + m * n * jnp.dtype(out_dtype).itemsize     # output written once
        ),
    )

    return pl.pallas_call(
        _tiled_matmul_kernel,
        out_shape=jax.ShapeDtypeStruct((m, n), out_dtype),
        grid=(grid_m, grid_n, grid_k),
        in_specs=[
            pl.BlockSpec((tm_e, tk_e), lambda i, j, kk: (i, kk)),
            pl.BlockSpec((tk_e, tn_e), lambda i, j, kk: (kk, j)),
        ],
        out_specs=pl.BlockSpec((tm_e, tn_e), lambda i, j, kk: (i, j)),
        scratch_shapes=[pltpu.VMEM((tm_e, tn_e), jnp.float32)],
        compiler_params=pltpu.CompilerParams(
            # M/N parallel so v7x's 2 TensorCores can split the grid; K is the
            # sequential reduction.  If grid_m collapses to 1 for your shapes,
            # prefer shrinking tn/tm so some parallel extent stays > 1.
            dimension_semantics=("parallel", "parallel", "arbitrary")
        ),
        cost_estimate=cost,
    )(x, weight)


# --------------------------------------------------------------------------
# Forward (ToyModel.forward): out = x @ weight
# --------------------------------------------------------------------------
def _toy_model_forward_impl(x, weight):
    m, k = x.shape
    k2, n = weight.shape
    assert k == k2, "inner dims must match"
    out_dtype = jnp.result_type(x.dtype, weight.dtype)

    # Truly tiny problems (the ToyModel case) take the grid-free VPU path;
    # everything else takes the tiled MXU accumulator path (which degenerates
    # to a single-grid-step MXU dot for medium shapes).
    if k <= 8 and m <= 128 and n <= 128:
        return _tiny_matmul(x, weight, out_dtype)
    return _tiled_matmul(x, weight, out_dtype)


# jit the whole forward so (optional) K-pad + pallas_call dispatch as one
# executable.
toy_model_forward = jax.jit(_toy_model_forward_impl)


if __name__ == "__main__":
    # Deterministic inputs mirroring the PyTorch module defaults:
    #   x = torch.Tensor(1, 2).fill_(0.8)
    #   weight = Parameter(torch.Tensor(2, 3).fill_(0.5))
    x = jnp.full((1, 2), 0.8, dtype=jnp.float32)
    weight = jnp.full((2, 3), 0.5, dtype=jnp.float32)

    out = toy_model_forward(x, weight)
    jax.block_until_ready(out)
    ref = jnp.matmul(x, weight)
    assert out.shape == (1, 3)
    assert jnp.allclose(out, ref, atol=1e-6), (out, ref)

    # "weight passed at call time" branch with random values from PRNGKey(0).
    key = jax.random.PRNGKey(0)
    kx, kw, kx2, kw2 = jax.random.split(key, 4)
    x2 = jax.random.normal(kx, (1, 2), dtype=jnp.float32)
    w2 = jax.random.normal(kw, (2, 3), dtype=jnp.float32)
    out2 = toy_model_forward(x2, w2)
    jax.block_until_ready(out2)
    assert jnp.allclose(out2, jnp.matmul(x2, w2), atol=1e-5)

    # Exercise the tiled MXU path: ragged M edge (640 = 512 + 128 masked
    # block), K padded 768 -> 1024 (two-step reduction), pl.when-guarded
    # final store.
    xb = jax.random.normal(kx2, (640, 768), dtype=jnp.float32)
    wb = jax.random.normal(kw2, (768, 512), dtype=jnp.float32)
    outb = toy_model_forward(xb, wb)
    jax.block_until_ready(outb)
    assert outb.shape == (640, 512)
    assert jnp.allclose(outb, jnp.matmul(xb, wb), rtol=1e-3, atol=1e-3)

    print("KERNEL_OK")
</pallas_src>

<mosaic_0001>
module attributes {stable_mosaic.version = 11 : i64} {
  func.func @_tiny_matmul_kernel(%arg0: memref<1x2xf32, #tpu.memory_space<vmem>>, %arg1: memref<2x3xf32, #tpu.memory_space<vmem>>, %arg2: memref<1x3xf32, #tpu.memory_space<vmem>>) attributes {dimension_semantics = [], scalar_prefetch = 0 : i64, scratch_operands = 0 : i64, tpu.core_type = #tpu.core_type<tc>} {
    %c0 = arith.constant 0 : index
    %c0_0 = arith.constant 0 : index
    %0 = vector.load %arg0[%c0, %c0_0] : memref<1x2xf32, #tpu.memory_space<vmem>>, vector<1x2xf32>
    %c0_1 = arith.constant 0 : index
    %c0_2 = arith.constant 0 : index
    %1 = vector.load %arg1[%c0_1, %c0_2] : memref<2x3xf32, #tpu.memory_space<vmem>>, vector<2x3xf32>
    %2 = vector.extract_strided_slice %0 {offsets = [0, 0], sizes = [1, 1], strides = [1, 1]} : vector<1x2xf32> to vector<1x1xf32>
    %3 = vector.extract_strided_slice %1 {offsets = [0, 0], sizes = [1, 3], strides = [1, 1]} : vector<2x3xf32> to vector<1x3xf32>
    %4 = vector.broadcast %2 : vector<1x1xf32> to vector<1x3xf32>
    %5 = arith.mulf %4, %3 : vector<1x3xf32>
    %6 = vector.extract_strided_slice %0 {offsets = [0, 1], sizes = [1, 1], strides = [1, 1]} : vector<1x2xf32> to vector<1x1xf32>
    %7 = vector.extract_strided_slice %1 {offsets = [1, 0], sizes = [1, 3], strides = [1, 1]} : vector<2x3xf32> to vector<1x3xf32>
    %8 = vector.broadcast %6 : vector<1x1xf32> to vector<1x3xf32>
    %9 = arith.mulf %8, %7 : vector<1x3xf32>
    %10 = arith.addf %5, %9 : vector<1x3xf32>
    %c0_3 = arith.constant 0 : index
    %c0_4 = arith.constant 0 : index
    %11 = vector.load %arg2[%c0_3, %c0_4] : memref<1x3xf32, #tpu.memory_space<vmem>>, vector<1x3xf32>
    tpu.vector_store %arg2[%c0_3, %c0_4], %10 {strides = array<i32>} : memref<1x3xf32, #tpu.memory_space<vmem>>, vector<1x3xf32>,
    return
  }
}

</mosaic_0001>

<llo_original>
// kernel: _toy_model_forward_impl.1
$region0: #{_toy_model_forward_impl.1}
  #allocation0 [shape = 'u32[]', space=smem, size = 0x4, offset = 0x4, fixed_abs, tag = 'smem constant byte address 0x4 - core index']
  #allocation1 [shape = 'u32[144,128]{1,0:T(1,128)}', space=vmem, size = 0x12000, scoped, tag = 'internal scratch']
  %s0 = inlined_call_operand.hbm [shape: f32[1,2], index: 0, kind: input, shape index: {}]
  %s1 = inlined_call_operand.vmem [shape: f32[2,3], index: 1, kind: input, shape index: {}]
  %s2 = inlined_call_operand.hbm [shape: f32[1,3], index: 2, kind: output, shape index: {}]
  %s3 = sld [smem:[#allocation0]]
  $region22: #{_toy_model_forward_impl.1} parent=0
    _
  %s5 = ssub.s32 1, %s3
  %s6 = scalar_select 0, %s5, %s3
  $region1: #{_toy_model_forward_impl.1} parent=0
    #allocation2 [shape = 'u8[512]{0}', space=vmem, size = 0x400, scoped, tag = 'input window, operand 0, single buffered']
    #allocation3 [shape = 's32[1]{0}', space=sflag, size = 0x4, scoped, tag = 'scoped memory for _toy_model_forward_impl.1']
    #allocation4 [shape = 's32[1]{0}', space=sflag, size = 0x4, scoped, tag = 'scoped memory for _toy_model_forward_impl.1']
    #allocation5 [shape = 'u8[512]{0}', space=vmem, size = 0x400, scoped, tag = 'output window, operand 0, single buffered']
    %7 = vsyncpa [#allocation3], 0
    %8 = vsyncpa [#allocation4], 0
    // Predicated region
    $region2: #{_toy_model_forward_impl.1} parent=1 // pred_check
      _
    $region3: #{_toy_model_forward_impl.1} parent=1 // pred_check_branch
      %10 = sbr.rel (0) target = $region5
    $region4: #{_toy_model_forward_impl.1} parent=1 // pred_region
      %s12 = ssub.s32 16, 16
      %13 = vsyncadd [#allocation3], %s12
      %s15 = sshll.u32 [#allocation2], 4
      %s16 = int_to_ptr.vmem [resolvable:$true] %s15
      %18 = dma.hbm_to_vmem [thread:$0]  %s0, 16, %s16, [#allocation3]
    $region5: #{_toy_model_forward_impl.1} parent=1 // pred_fallthru
      _
    // Predicated region
    $region6: #{_toy_model_forward_impl.1} parent=1 // pred_check
      _
    $region7: #{_toy_model_forward_impl.1} parent=1 // pred_check_branch
      %20 = sbr.rel (0) target = $region9
    $region8: #{_toy_model_forward_impl.1} parent=1 // pred_region
      _
    $region9: #{_toy_model_forward_impl.1} parent=1 // pred_fallthru
      _
    // Predicated region
    $region10: #{_toy_model_forward_impl.1} parent=1 // pred_check
      _
    $region11: #{_toy_model_forward_impl.1} parent=1 // pred_check_branch
      %22 = sbr.rel (0) target = $region13
    $region12: #{_toy_model_forward_impl.1} parent=1 // pred_region
      %23 = dma.done [#allocation3], 16
    $region13: #{_toy_model_forward_impl.1} parent=1 // pred_fallthru
      _
    %v24 = vld [vmem:[#allocation2] sm:$0x1]
    %v25 = vld [vmem:[%s1] sm:$0x3]
    %27 = vset.pattern.permute.xlu0 0
    %28 = vperm.xlu0 %27, %v24
    %v29 = vpop.permute.xlu0 %28
    %v31 = vlaneseq
    %v32 = vshrl.u32 %v31, 7
    %v33 = vsub.s32 0, %v32
    %v34 = vrot.slane %v29, %v33
    %v35 = vmul.f32 %v34, %v25
    %36 = vset.pattern.permute.xlu0 1
    %37 = vperm.xlu0 %36, %v24
    %v38 = vpop.permute.xlu0 %37
    %v40 = vlaneseq
    %v41 = vshrl.u32 %v40, 7
    %v42 = vsub.s32 0, %v41
    %v43 = vrot.slane %v38, %v42
    %v44 = vmul.f32 %v43, %v25
    %v46 = vrot.slane %v44, 1
    %v48 = vadd.f32 %v35, %v46
    %vm49 = vcmask 16384
    %50 = vst.msk [vmem:[#allocation5] sm:$0x1] %vm49, %v48
    // Predicated region
    $region14: #{_toy_model_forward_impl.1} parent=1 // pred_check
      _
    $region15: #{_toy_model_forward_impl.1} parent=1 // pred_check_branch
      %52 = sbr.rel (0) target = $region17
    $region16: #{_toy_model_forward_impl.1} parent=1 // pred_region
      %s54 = ssub.s32 16, 16
      %55 = vsyncadd [#allocation4], %s54
      %s57 = sshll.u32 [#allocation5], 4
      %s58 = int_to_ptr.vmem [resolvable:$true] %s57
      %60 = dma.vmem_to_hbm [thread:$0]  %s58, 16, %s2, [#allocation4]
    $region17: #{_toy_model_forward_impl.1} parent=1 // pred_fallthru
      _
    // Predicated region
    $region18: #{_toy_model_forward_impl.1} parent=1 // pred_check
      _
    $region19: #{_toy_model_forward_impl.1} parent=1 // pred_check_branch
      %62 = sbr.rel (0) target = $region21
    $region20: #{_toy_model_forward_impl.1} parent=1 // pred_region
      %63 = dma.done [#allocation4], 16
    $region21: #{_toy_model_forward_impl.1} parent=1 // pred_fallthru
      _
    %64 = vsyncpa [#allocation3], 1
    %65 = vsyncpa [#allocation4], 1

</llo_original>
